<compile_context>
chip_gen: v6e
topology: v6e:2x2x1
jax: 0.10.0
libtpu: 0.0.40
codegen_flags: <defaults>
</compile_context>

<pallas_src>
import functools

import jax
import jax.numpy as jnp
from jax.experimental import pallas as pl
from jax.experimental.pallas import tpu as pltpu


def _round_down(x: int, m: int) -> int:
    return (x // m) * m


def _sublane_align(dtype) -> int:
    # Sub-32-bit dtypes pack along sublanes: bf16 vreg is [16,128], int8/fp8 [32,128].
    return {4: 8, 2: 16, 1: 32}.get(jnp.dtype(dtype).itemsize, 8)


def _rmsnorm_kernel(x_ref, w_ref, o_ref, *, eps: float, inv_dim: float):
    # x_ref: (tile_rows, dim), w_ref: (1, dim) in weight's native dtype.
    x = x_ref[...].astype(jnp.float32)
    # mean(x^2) as sum * (1/dim): reduction on XLU, constant scale on VPU.
    mean_sq = jnp.sum(x * x, axis=-1, keepdims=True) * inv_dim
    inv = jax.lax.rsqrt(mean_sq + eps)            # EUP
    normed = (x * inv).astype(x_ref.dtype)        # PyTorch: .type_as(x) BEFORE * weight
    # Multiply in the promoted dtype of (x.dtype, weight.dtype) == o_ref.dtype,
    # matching torch's `output * self.weight` promotion semantics.
    o_ref[...] = (normed * w_ref[...]).astype(o_ref.dtype)


def rmsnorm(x: jax.Array, weight: jax.Array, eps: float = 1e-6, *,
            tile_rows: int | None = None) -> jax.Array:
    """RMSNorm over the last axis of x.  x: (..., dim), weight: (dim,)."""
    orig_shape = x.shape
    dim = orig_shape[-1]
    assert weight.shape == (dim,), "weight must have shape (dim,)"

    rows = 1
    for s in orig_shape[:-1]:
        rows *= s
    rows = max(int(rows), 1)

    in_itemsize = jnp.dtype(x.dtype).itemsize
    out_dtype = jnp.promote_types(x.dtype, weight.dtype)
    out_itemsize = jnp.dtype(out_dtype).itemsize
    w_itemsize = jnp.dtype(weight.dtype).itemsize

    x2d = x.reshape(rows, dim)
    w2d = weight.reshape(1, dim)          # native dtype, no wrapper-side astype

    # ---- row-tile selection: dim stays whole; ~4 MiB f32 working tile ----
    align = _sublane_align(x.dtype)
    if tile_rows is None:
        target_f32_bytes = 4 * 1024 * 1024
        tile_rows = max(align, _round_down(target_f32_bytes // (dim * 4), align))
    if tile_rows >= rows:
        tile_rows = rows                  # single full-extent block (always legal)
    else:
        tile_rows = max(align, _round_down(int(tile_rows), align))

    grid_steps = int(pl.cdiv(rows, tile_rows))

    # ---- VMEM budget: buffered in/out tiles + in-kernel f32 temporaries ----
    in_bufs = 3 if grid_steps >= 3 else 2
    in_tile = tile_rows * dim * in_itemsize
    out_tile = tile_rows * dim * out_itemsize
    f32_tile = tile_rows * dim * 4
    vmem_needed = (in_bufs * in_tile + 2 * out_tile + 3 * f32_tile
                   + 2 * dim * w_itemsize + (2 << 20))
    vmem_limit = int(min(max(vmem_needed, 16 << 20), 64 << 20))   # per-TC cap (v7x)

    # ---- BlockSpecs (deeper input buffering when the grid is long enough) ----
    x_index = lambda i: (i, 0)
    x_spec = pl.BlockSpec((tile_rows, dim), x_index)
    if grid_steps >= 3:
        try:
            x_spec = pl.BlockSpec((tile_rows, dim), x_index,
                                  pipeline_mode=pl.Buffered(3))
        except TypeError:
            x_spec = pl.BlockSpec((tile_rows, dim), x_index)

    cost = pl.CostEstimate(
        flops=int(4 * rows * dim),
        transcendentals=int(rows),
        bytes_accessed=int(rows * dim * (in_itemsize + out_itemsize)
                           + dim * w_itemsize),
    )

    out = pl.pallas_call(
        functools.partial(_rmsnorm_kernel, eps=float(eps), inv_dim=1.0 / float(dim)),
        out_shape=jax.ShapeDtypeStruct((rows, dim), out_dtype),
        grid_spec=pltpu.PrefetchScalarGridSpec(
            num_scalar_prefetch=0,
            grid=(grid_steps,),
            in_specs=[
                x_spec,
                pl.BlockSpec((1, dim), lambda i: (0, 0)),
            ],
            out_specs=pl.BlockSpec((tile_rows, dim), lambda i: (i, 0)),
        ),
        compiler_params=pltpu.CompilerParams(
            dimension_semantics=("parallel",),
            vmem_limit_bytes=vmem_limit,
        ),
        cost_estimate=cost,
    )(x2d, w2d)

    return out.reshape(orig_shape[:-1] + (dim,))


if __name__ == "__main__":
    eps = 1e-6

    def ref_rmsnorm(x, w, eps):
        xf = x.astype(jnp.float32)
        n = xf * jax.lax.rsqrt(jnp.mean(xf * xf, axis=-1, keepdims=True) + eps)
        return n.astype(x.dtype) * w

    dim = 128
    key = jax.random.PRNGKey(0)
    k1, k2, k3, k4, k5 = jax.random.split(key, 5)

    # Case 1: (batch=2, seq=8, dim=128) f32, weight = ones (module init).
    x1 = jax.random.normal(k1, (2, 8, dim), dtype=jnp.float32)
    w1 = jnp.ones((dim,), dtype=jnp.float32)
    y1 = jax.block_until_ready(rmsnorm(x1, w1, eps=eps))
    r1 = ref_rmsnorm(x1, w1, eps)
    assert y1.shape == r1.shape and y1.dtype == r1.dtype
    assert jnp.allclose(y1, r1, atol=1e-5, rtol=1e-5)

    # Case 2: rows = 15 (not a multiple of 8) -> single full-extent block;
    # non-trivial weight exercises the broadcast multiply.
    x2 = jax.random.normal(k2, (3, 5, dim), dtype=jnp.float32)
    w2 = 0.5 + jax.random.uniform(k3, (dim,), dtype=jnp.float32)
    y2 = jax.block_until_ready(rmsnorm(x2, w2, eps=eps))
    r2 = ref_rmsnorm(x2, w2, eps)
    assert y2.shape == r2.shape and y2.dtype == r2.dtype
    assert jnp.allclose(y2, r2, atol=1e-5, rtol=1e-5)

    # Case 3: forced small row tile -> multi-step grid (16+16+3) with a ragged
    # last block: exercises Pallas-masked boundary stores (no wrapper pad/slice).
    x3 = jax.random.normal(k4, (5, 7, dim), dtype=jnp.float32)
    y3 = jax.block_until_ready(rmsnorm(x3, w2, eps=eps, tile_rows=16))
    r3 = ref_rmsnorm(x3, w2, eps)
    assert y3.shape == r3.shape and y3.dtype == r3.dtype
    assert jnp.allclose(y3, r3, atol=1e-5, rtol=1e-5)

    # Case 4: bf16 input with the module's default f32 weight -> promoted f32
    # output, matching torch's `output * self.weight` promotion.
    x4 = jax.random.normal(k5, (2, 8, dim), dtype=jnp.bfloat16)
    y4 = jax.block_until_ready(rmsnorm(x4, w2, eps=eps))
    r4 = ref_rmsnorm(x4, w2, eps)
    assert y4.shape == r4.shape and y4.dtype == r4.dtype
    assert jnp.allclose(y4, r4, atol=1e-2, rtol=1e-2)

    print("KERNEL_OK")
</pallas_src>

<mosaic_0001>
module attributes {stable_mosaic.version = 11 : i64} {
  func.func @_rmsnorm_kernel(%arg0: i32, %arg1: memref<16x128xf32, #tpu.memory_space<vmem>>, %arg2: memref<1x128xf32, #tpu.memory_space<vmem>>, %arg3: memref<16x128xf32, #tpu.memory_space<vmem>>) attributes {dimension_semantics = [#tpu.dimension_semantics<parallel>], iteration_bounds = array<i64: 1>, scalar_prefetch = 0 : i64, scratch_operands = 0 : i64, tpu.core_type = #tpu.core_type<tc>, window_params = [{transform_indices = @transform_0, window_bounds = array<i64: 16, 128>}, {pipeline_mode = #tpu.pipeline_mode<synchronous>, transform_indices = @transform_1, window_bounds = array<i64: 1, 128>}, {transform_indices = @transform_2, window_bounds = array<i64: 16, 128>}]} {
    %c0 = arith.constant 0 : index
    %c0_0 = arith.constant 0 : index
    %0 = vector.load %arg1[%c0, %c0_0] : memref<16x128xf32, #tpu.memory_space<vmem>>, vector<16x128xf32>
    %1 = arith.mulf %0, %0 : vector<16x128xf32>
    %cst = arith.constant dense<0.000000e+00> : vector<16xf32>
    %2 = vector.multi_reduction <add>, %1, %cst [1] : vector<16x128xf32> to vector<16xf32>
    %3 = vector.shape_cast %2 : vector<16xf32> to vector<16x1xf32>
    %cst_1 = arith.constant 7.812500e-03 : f32
    %4 = vector.broadcast %cst_1 : f32 to vector<16x1xf32>
    %5 = arith.mulf %3, %4 : vector<16x1xf32>
    %cst_2 = arith.constant 9.99999997E-7 : f32
    %6 = vector.broadcast %cst_2 : f32 to vector<16x1xf32>
    %7 = arith.addf %5, %6 : vector<16x1xf32>
    %8 = math.rsqrt %7 : vector<16x1xf32>
    %9 = vector.broadcast %8 : vector<16x1xf32> to vector<16x128xf32>
    %10 = arith.mulf %0, %9 : vector<16x128xf32>
    %c0_3 = arith.constant 0 : index
    %c0_4 = arith.constant 0 : index
    %11 = vector.load %arg2[%c0_3, %c0_4] : memref<1x128xf32, #tpu.memory_space<vmem>>, vector<1x128xf32>
    %12 = vector.broadcast %11 : vector<1x128xf32> to vector<16x128xf32>
    %13 = arith.mulf %10, %12 : vector<16x128xf32>
    %c0_5 = arith.constant 0 : index
    %c0_6 = arith.constant 0 : index
    %14 = vector.load %arg3[%c0_5, %c0_6] : memref<16x128xf32, #tpu.memory_space<vmem>>, vector<16x128xf32>
    tpu.vector_store %arg3[%c0_5, %c0_6], %13 {strides = array<i32>} : memref<16x128xf32, #tpu.memory_space<vmem>>, vector<16x128xf32>,
    return
  }
  func.func @transform_0(%arg0: i32) -> (i32, i32) {
    %c0_i32 = arith.constant 0 : i32
    %c0_i32_0 = arith.constant 0 : i32
    return %arg0, %c0_i32 : i32, i32
  }
  func.func @transform_1(%arg0: i32) -> (i32, i32) {
    %c0_i32 = arith.constant 0 : i32
    %c0_i32_0 = arith.constant 0 : i32
    %c0_i32_1 = arith.constant 0 : i32
    return %c0_i32, %c0_i32_0 : i32, i32
  }
  func.func @transform_2(%arg0: i32) -> (i32, i32) {
    %c0_i32 = arith.constant 0 : i32
    %c0_i32_0 = arith.constant 0 : i32
    return %arg0, %c0_i32 : i32, i32
  }
}

</mosaic_0001>

<llo_original>
// kernel: tpu_custom_call.1
$region0: #{tpu_custom_call.1}
  #allocation0 [shape = 'u32[]', space=smem, size = 0x4, offset = 0x4, fixed_abs, tag = 'smem constant byte address 0x4 - core index']
  #allocation1 [shape = 'u32[144,128]{1,0:T(1,128)}', space=vmem, size = 0x12000, scoped, tag = 'internal scratch']
  %s0 = inlined_call_operand.hbm [shape: f32[16,128], index: 0, kind: input, shape index: {}]
  %s1 = inlined_call_operand.vmem [shape: f32[1,128], index: 1, kind: input, shape index: {}]
  %s2 = inlined_call_operand.hbm [shape: f32[16,128], index: 2, kind: output, shape index: {}]
  %s3 = sld [smem:[#allocation0]]
  $region22: #{tpu_custom_call.1} parent=0
    _
  %s5 = ssub.s32 1, %s3
  %s6 = scalar_select 0, %s5, %s3
  $region1: #{tpu_custom_call.1} parent=0
    #allocation2 [shape = 'u8[8192]{0}', space=vmem, size = 0x2000, scoped, tag = 'input window, operand 0, single buffered']
    #allocation3 [shape = 's32[1]{0}', space=sflag, size = 0x4, scoped, tag = 'scoped memory for tpu_custom_call.1']
    #allocation4 [shape = 's32[1]{0}', space=sflag, size = 0x4, scoped, tag = 'scoped memory for tpu_custom_call.1']
    #allocation5 [shape = 'u8[8192]{0}', space=vmem, size = 0x2000, scoped, tag = 'output window, operand 0, single buffered']
    %7 = vsyncpa [#allocation3], 0
    %8 = vsyncpa [#allocation4], 0
    // Predicated region
    $region2: #{tpu_custom_call.1} parent=1 // pred_check
      _
    $region3: #{tpu_custom_call.1} parent=1 // pred_check_branch
      %10 = sbr.rel (0) target = $region5
    $region4: #{tpu_custom_call.1} parent=1 // pred_region
      %s12 = ssub.s32 256, 256
      %13 = vsyncadd [#allocation3], %s12
      %s14 = sshll.u32 [#allocation2], 4
      %s15 = int_to_ptr.vmem [resolvable:$true] %s14
      %20 = dma.hbm_to_vmem [thread:$0]  %s0, 256, %s15, [#allocation3], 128, 128, 8
    $region5: #{tpu_custom_call.1} parent=1 // pred_fallthru
      _
    // Predicated region
    $region6: #{tpu_custom_call.1} parent=1 // pred_check
      _
    $region7: #{tpu_custom_call.1} parent=1 // pred_check_branch
      %22 = sbr.rel (0) target = $region9
    $region8: #{tpu_custom_call.1} parent=1 // pred_region
      _
    $region9: #{tpu_custom_call.1} parent=1 // pred_fallthru
      _
    // Predicated region
    $region10: #{tpu_custom_call.1} parent=1 // pred_check
      _
    $region11: #{tpu_custom_call.1} parent=1 // pred_check_branch
      %24 = sbr.rel (0) target = $region13
    $region12: #{tpu_custom_call.1} parent=1 // pred_region
      %25 = dma.done [#allocation3], 256
    $region13: #{tpu_custom_call.1} parent=1 // pred_fallthru
      _
    %v26 = vld [vmem:[#allocation2] sm:$0xff]
    %v27 = vld [vmem:[#allocation2 + $0x8] sm:$0xff]
    %v28 = vmul.f32 %v26, %v26
    %v29 = vmul.f32 %v27, %v27
    %30 = vadd.xlane.f32.xlu0 %v28
    %v31 = vpop.xlane.xlu0 %30
    %32 = vadd.xlane.f32.xlu0 %v29
    %v33 = vpop.xlane.xlu0 %32
    %v34 = vmul.f32 %v31, 0.0078125
    %v35 = vmul.f32 %v33, 0.0078125
    %v36 = vadd.f32 %v34, 1e-06
    %v37 = vadd.f32 %v35, 1e-06
    %v38 = vrsqrt.pop %v36
    %v39 = vrsqrt.pop %v37
    %v40 = vmul.f32 %v26, %v38
    %v41 = vmul.f32 %v27, %v39
    %v42 = vld [vmem:[%s1] sm:$0x1]
    %v44 = vlaneseq
    %v45 = vshrl.u32 %v44, 7
    %v46 = vsub.s32 0, %v45
    %v47 = vrot.slane %v42, %v46
    %v49 = vmul.f32 %v40, %v47
    %v50 = vmul.f32 %v41, %v47
    %51 = vst [vmem:[#allocation5] sm:$0xff] %v49
    %52 = vst [vmem:[#allocation5 + $0x8] sm:$0xff] %v50
    // Predicated region
    $region14: #{tpu_custom_call.1} parent=1 // pred_check
      _
    $region15: #{tpu_custom_call.1} parent=1 // pred_check_branch
      %54 = sbr.rel (0) target = $region17
    $region16: #{tpu_custom_call.1} parent=1 // pred_region
      %s56 = ssub.s32 256, 256
      %57 = vsyncadd [#allocation4], %s56
      %s58 = sshll.u32 [#allocation5], 4
      %s59 = int_to_ptr.vmem [resolvable:$true] %s58
      %64 = dma.vmem_to_hbm [thread:$0]  %s59, 256, %s2, [#allocation4], 128, 128, 8
    $region17: #{tpu_custom_call.1} parent=1 // pred_fallthru
      _
    // Predicated region
    $region18: #{tpu_custom_call.1} parent=1 // pred_check
      _
    $region19: #{tpu_custom_call.1} parent=1 // pred_check_branch
      %66 = sbr.rel (0) target = $region21
    $region20: #{tpu_custom_call.1} parent=1 // pred_region
      %67 = dma.done [#allocation4], 256
    $region21: #{tpu_custom_call.1} parent=1 // pred_fallthru
      _
    %68 = vsyncpa [#allocation3], 1
    %69 = vsyncpa [#allocation4], 1

</llo_original>
